<compile_context>
chip_gen: v6e
topology: v6e:2x2x1
jax: 0.10.0
libtpu: 0.0.40
codegen_flags: <defaults>
</compile_context>

<pallas_src>
import functools

import jax
import jax.numpy as jnp
from jax import lax
from jax.experimental import pallas as pl
from jax.experimental.pallas import tpu as pltpu


def _round_up(x, m):
    return ((x + m - 1) // m) * m


def fused_basic_block_kernel(x_ref, w_ref, b_ref, o_ref, act_buf, col_buf,
                             *, H, W, M):
    """Whole BasicBlock (layer_num x [conv3x3 + BN(eval) + ReLU]) for one image.

    x_ref:   (1, Cin, H*W)        input image, NCHW with spatial flattened
    w_ref:   (L, C, 9*C)          channel-major im2col weights, BN scale folded
    b_ref:   (L, C, 1)            folded conv-bias + BN shift
    o_ref:   (1, C, H*W)          output (already NCHW-flat, lane-dense H*W)
    act_buf: (C, M + H*W + M)     VMEM activation with zero margins (halo)
    col_buf: (9*C, H*W)           VMEM im2col matrix (lane-dense over H*W)
    """
    cin = x_ref.shape[1]
    L, C, _ = w_ref.shape
    HW = H * W

    # Zero once per image: the margins stay zero forever because every later
    # store only touches the centre [M, M+HW).  The zero margins provide the
    # 'SAME' y-halo for free in the flattened layout.
    act_buf[...] = jnp.zeros(act_buf.shape, act_buf.dtype)
    act_buf[pl.ds(0, cin), pl.ds(M, HW)] = x_ref[0].astype(jnp.float32)

    # Static x-validity masks: in the flattened layout an x-shift wraps across
    # rows, so the wrapped columns must be zeroed (only dx != 1 needs it).
    xx = lax.broadcasted_iota(jnp.int32, (1, HW), 1) % W
    x_mask = {-1: xx >= 1, 0: None, 1: xx < (W - 1)}

    for l in range(L):
        # im2col: tap (dy, dx) is the activation window at static lane offset
        # M + (dy-1)*W + (dx-1); y-halo comes from the zero margins, x-wrap
        # columns are masked.  K = 9*C -> one MXU matmul per layer.
        for dy in range(3):
            for dx in range(3):
                tap = dy * 3 + dx
                delta = (dy - 1) * W + (dx - 1)
                win = act_buf[:, pl.ds(M + delta, HW)]
                m = x_mask[dx - 1]
                if m is not None:
                    win = jnp.where(m, win, 0.0)
                col_buf[pl.ds(tap * C, C), :] = win

        y = jnp.dot(w_ref[l], col_buf[...],
                    preferred_element_type=jnp.float32)       # (C, H*W)
        y = jnp.maximum(y + b_ref[l], 0.0)                    # folded BN + ReLU

        if l < L - 1:
            # Intermediate activation stays resident in VMEM (no HBM trip).
            act_buf[:, pl.ds(M, HW)] = y
        else:
            o_ref[...] = y.reshape(1, C, HW).astype(o_ref.dtype)


def init_basic_block_params(key, layer_num, in_planes, planes):
    """Deterministic synthetic params mirroring BasicBlock.__init__ shapes.

    Returns per-layer (w_hwio, scale, bias) with eval-mode BatchNorm (+ conv
    bias) folded into a per-output-channel affine (scale, bias).
    """
    params = []
    cin = in_planes
    eps = 1e-5
    for _ in range(layer_num):
        key, kw, kb, kg, kbe = jax.random.split(key, 5)
        fan_in = cin * 3 * 3
        w = jax.random.normal(kw, (3, 3, cin, planes), jnp.float32) * (
            2.0 / fan_in) ** 0.5                              # HWIO conv weight
        conv_b = jax.random.normal(kb, (planes,), jnp.float32) * 0.01
        gamma = 1.0 + 0.1 * jax.random.normal(kg, (planes,), jnp.float32)
        beta = 0.1 * jax.random.normal(kbe, (planes,), jnp.float32)
        running_mean = jnp.zeros((planes,), jnp.float32)      # PyTorch BN defaults
        running_var = jnp.ones((planes,), jnp.float32)

        scale = gamma / jnp.sqrt(running_var + eps)
        bias = beta + scale * (conv_b - running_mean)
        params.append((w, scale, bias))
        cin = planes
    return params


def pack_block_params(params, in_planes, planes, compute_dtype=jnp.float32):
    """Pad channels, fold BN scale into weights, build channel-major im2col mats."""
    L = len(params)
    c_pad = _round_up(max(in_planes, planes), 8)
    w_mats, biases = [], []
    for l, (w, scale, bias) in enumerate(params):
        cin = in_planes if l == 0 else planes
        wp = jnp.zeros((3, 3, c_pad, c_pad), jnp.float32)
        wp = wp.at[:, :, :cin, :planes].set(w * scale)        # fold BN scale
        # (3,3,Cin,Cout) -> (9*C, Cout) -> (Cout, 9*C)  [row = tap*C + cin]
        w_mats.append(jnp.transpose(wp.reshape(9 * c_pad, c_pad)))
        biases.append(jnp.zeros((c_pad,), jnp.float32).at[:planes].set(bias))
    w_t = jnp.stack(w_mats).astype(compute_dtype)              # (L, C, 9*C)
    bias_all = jnp.stack(biases).reshape(L, c_pad, 1)          # (L, C, 1)
    return w_t, bias_all, c_pad


def basic_block_forward(x_nchw, packed, planes):
    """Forward pass of BasicBlock. Input/output are NCHW like PyTorch."""
    w_t, bias_all, c_pad = packed
    N, cin, H, W = x_nchw.shape
    HW = H * W
    L, _, K = w_t.shape
    # Halo margin: >= W+1 and a multiple of 128 so the centre store is aligned.
    M = _round_up(W + 1, 128)

    # Free metadata reshape only (NCHW is contiguous) — no transpose anywhere.
    x_flat = x_nchw.reshape(N, cin, HW)

    out = pl.pallas_call(
        functools.partial(fused_basic_block_kernel, H=H, W=W, M=M),
        out_shape=jax.ShapeDtypeStruct((N, c_pad, HW), x_nchw.dtype),
        grid=(N,),
        in_specs=[
            pl.BlockSpec((1, cin, HW), lambda n: (n, 0, 0)),
            pl.BlockSpec((L, c_pad, K), lambda n: (0, 0, 0)),
            pl.BlockSpec((L, c_pad, 1), lambda n: (0, 0, 0)),
        ],
        out_specs=pl.BlockSpec((1, c_pad, HW), lambda n: (n, 0, 0)),
        scratch_shapes=[
            pltpu.VMEM((c_pad, M + HW + M), jnp.float32),     # zero-margin act
            pltpu.VMEM((9 * c_pad, HW), jnp.float32),         # im2col matrix
        ],
        compiler_params=pltpu.CompilerParams(
            dimension_semantics=("parallel",)),
    )(x_flat, w_t, bias_all)

    # (N, C_pad, H*W) -> (N, planes, H, W): contiguous reshape + channel slice,
    # no transpose needed (slice is a no-op when planes == c_pad).
    return out.reshape(N, c_pad, H, W)[:, :planes]


def basic_block_reference(x_nchw, params):
    """Plain-JAX reference (lax.conv) for correctness checking."""
    x = jnp.transpose(x_nchw, (0, 2, 3, 1))
    for w, scale, bias in params:
        y = lax.conv_general_dilated(
            x, w, window_strides=(1, 1), padding="SAME",
            dimension_numbers=("NHWC", "HWIO", "NHWC"),
        )
        x = jnp.maximum(y * scale + bias, 0.0)
    return jnp.transpose(x, (0, 3, 1, 2))


if __name__ == "__main__":
    layer_num, in_planes, planes = 2, 4, 8
    N, H, W = 2, 16, 16

    key = jax.random.PRNGKey(0)
    key, kx = jax.random.split(key)
    x = jax.random.normal(kx, (N, in_planes, H, W), jnp.float32)   # NCHW input

    params = init_basic_block_params(key, layer_num, in_planes, planes)
    packed = pack_block_params(params, in_planes, planes)

    out = jax.block_until_ready(basic_block_forward(x, packed, planes))
    ref = jax.block_until_ready(basic_block_reference(x, params))

    assert out.shape == (N, planes, H, W), out.shape
    assert jnp.allclose(out, ref, rtol=1e-3, atol=1e-3), "mismatch vs reference"

    print("KERNEL_OK")
</pallas_src>

<mosaic_0001>
module attributes {stable_mosaic.version = 11 : i64} {
  func.func @fused_basic_block_kernel(%arg0: i32, %arg1: memref<1x4x256xf32, #tpu.memory_space<vmem>>, %arg2: memref<2x8x72xf32, #tpu.memory_space<vmem>>, %arg3: memref<2x8x1xf32, #tpu.memory_space<vmem>>, %arg4: memref<1x8x256xf32, #tpu.memory_space<vmem>>, %arg5: memref<8x512xf32, #tpu.memory_space<vmem>>, %arg6: memref<72x256xf32, #tpu.memory_space<vmem>>) attributes {dimension_semantics = [#tpu.dimension_semantics<parallel>], iteration_bounds = array<i64: 2>, scalar_prefetch = 0 : i64, scratch_operands = 2 : i64, tpu.core_type = #tpu.core_type<tc>, window_params = [{transform_indices = @transform_0, window_bounds = array<i64: 1, 4, 256>}, {pipeline_mode = #tpu.pipeline_mode<synchronous>, transform_indices = @transform_1, window_bounds = array<i64: 2, 8, 72>}, {pipeline_mode = #tpu.pipeline_mode<synchronous>, transform_indices = @transform_2, window_bounds = array<i64: 2, 8, 1>}, {transform_indices = @transform_3, window_bounds = array<i64: 1, 8, 256>}]} {
    %cst = arith.constant 0.000000e+00 : f32
    %0 = vector.broadcast %cst : f32 to vector<8x512xf32>
    %c0 = arith.constant 0 : index
    %c0_0 = arith.constant 0 : index
    %1 = vector.load %arg5[%c0, %c0_0] : memref<8x512xf32, #tpu.memory_space<vmem>>, vector<8x512xf32>
    tpu.vector_store %arg5[%c0, %c0_0], %0 {strides = array<i32>} : memref<8x512xf32, #tpu.memory_space<vmem>>, vector<8x512xf32>,
    %c0_1 = arith.constant 0 : index
    %c0_2 = arith.constant 0 : index
    %c0_3 = arith.constant 0 : index
    %2 = vector.load %arg1[%c0_1, %c0_2, %c0_3] : memref<1x4x256xf32, #tpu.memory_space<vmem>>, vector<1x4x256xf32>
    %3 = vector.shape_cast %2 : vector<1x4x256xf32> to vector<4x256xf32>
    %c0_4 = arith.constant 0 : index
    %c128 = arith.constant 128 : index
    %4 = vector.load %arg5[%c0_4, %c128] : memref<8x512xf32, #tpu.memory_space<vmem>>, vector<4x256xf32>
    tpu.vector_store %arg5[%c0_4, %c128], %3 {strides = array<i32>} : memref<8x512xf32, #tpu.memory_space<vmem>>, vector<4x256xf32>,
    %5 = tpu.iota {dimensions = array<i32: 1>} : vector<1x256xi32>
    %c16_i32 = arith.constant 16 : i32
    %c0_i32 = arith.constant 0 : i32
    %6 = arith.cmpi eq, %c16_i32, %c0_i32 : i32
    %c1_i32 = arith.constant 1 : i32
    %7 = arith.select %6, %c1_i32, %c16_i32 : i32
    %8 = vector.broadcast %7 : i32 to vector<1x256xi32>
    %9 = arith.remsi %5, %8 : vector<1x256xi32>
    %c0_i32_5 = arith.constant 0 : i32
    %10 = vector.broadcast %c0_i32_5 : i32 to vector<1x256xi32>
    %11 = arith.cmpi ne, %9, %10 : vector<1x256xi32>
    %c0_i32_6 = arith.constant 0 : i32
    %12 = vector.broadcast %c0_i32_6 : i32 to vector<1x256xi32>
    %13 = arith.cmpi slt, %9, %12 : vector<1x256xi32>
    %c0_i32_7 = arith.constant 0 : i32
    %14 = arith.cmpi slt, %7, %c0_i32_7 : i32
    %15 = vector.broadcast %14 : i1 to vector<1x256xi1>
    %16 = vector.broadcast %15 : vector<1x256xi1> to vector<1x256xi1>
    %17 = arith.xori %13, %16 : vector<1x256xi1>
    %18 = arith.andi %17, %11 : vector<1x256xi1>
    %19 = vector.broadcast %7 : i32 to vector<1x256xi32>
    %20 = arith.addi %9, %19 : vector<1x256xi32>
    %21 = arith.select %18, %20, %9 : vector<1x256xi1>, vector<1x256xi32>
    %c1_i32_8 = arith.constant 1 : i32
    %22 = vector.broadcast %c1_i32_8 : i32 to vector<1x256xi32>
    %23 = arith.cmpi sge, %21, %22 : vector<1x256xi32>
    %c15_i32 = arith.constant 15 : i32
    %24 = vector.broadcast %c15_i32 : i32 to vector<1x256xi32>
    %25 = arith.cmpi slt, %21, %24 : vector<1x256xi32>
    %c0_9 = arith.constant 0 : index
    %c111 = arith.constant 111 : index
    %26 = vector.load %arg5[%c0_9, %c111] : memref<8x512xf32, #tpu.memory_space<vmem>>, vector<8x256xf32>
    %cst_10 = arith.constant 0.000000e+00 : f32
    %27 = vector.shape_cast %23 : vector<1x256xi1> to vector<1x256xi1>
    %28 = vector.broadcast %27 : vector<1x256xi1> to vector<8x256xi1>
    %29 = vector.broadcast %cst_10 : f32 to vector<8x256xf32>
    %30 = arith.select %28, %26, %29 : vector<8x256xi1>, vector<8x256xf32>
    %c0_11 = arith.constant 0 : index
    %c0_12 = arith.constant 0 : index
    %31 = vector.load %arg6[%c0_11, %c0_12] : memref<72x256xf32, #tpu.memory_space<vmem>>, vector<8x256xf32>
    tpu.vector_store %arg6[%c0_11, %c0_12], %30 {strides = array<i32>} : memref<72x256xf32, #tpu.memory_space<vmem>>, vector<8x256xf32>,
    %c0_13 = arith.constant 0 : index
    %c112 = arith.constant 112 : index
    %32 = vector.load %arg5[%c0_13, %c112] : memref<8x512xf32, #tpu.memory_space<vmem>>, vector<8x256xf32>
    %c8 = arith.constant 8 : index
    %c0_14 = arith.constant 0 : index
    %33 = vector.load %arg6[%c8, %c0_14] : memref<72x256xf32, #tpu.memory_space<vmem>>, vector<8x256xf32>
    tpu.vector_store %arg6[%c8, %c0_14], %32 {strides = array<i32>} : memref<72x256xf32, #tpu.memory_space<vmem>>, vector<8x256xf32>,
    %c0_15 = arith.constant 0 : index
    %c113 = arith.constant 113 : index
    %34 = vector.load %arg5[%c0_15, %c113] : memref<8x512xf32, #tpu.memory_space<vmem>>, vector<8x256xf32>
    %cst_16 = arith.constant 0.000000e+00 : f32
    %35 = vector.shape_cast %25 : vector<1x256xi1> to vector<1x256xi1>
    %36 = vector.broadcast %35 : vector<1x256xi1> to vector<8x256xi1>
    %37 = vector.broadcast %cst_16 : f32 to vector<8x256xf32>
    %38 = arith.select %36, %34, %37 : vector<8x256xi1>, vector<8x256xf32>
    %c16 = arith.constant 16 : index
    %c0_17 = arith.constant 0 : index
    %39 = vector.load %arg6[%c16, %c0_17] : memref<72x256xf32, #tpu.memory_space<vmem>>, vector<8x256xf32>
    tpu.vector_store %arg6[%c16, %c0_17], %38 {strides = array<i32>} : memref<72x256xf32, #tpu.memory_space<vmem>>, vector<8x256xf32>,
    %c0_18 = arith.constant 0 : index
    %c127 = arith.constant 127 : index
    %40 = vector.load %arg5[%c0_18, %c127] : memref<8x512xf32, #tpu.memory_space<vmem>>, vector<8x256xf32>
    %cst_19 = arith.constant 0.000000e+00 : f32
    %41 = vector.shape_cast %23 : vector<1x256xi1> to vector<1x256xi1>
    %42 = vector.broadcast %41 : vector<1x256xi1> to vector<8x256xi1>
    %43 = vector.broadcast %cst_19 : f32 to vector<8x256xf32>
    %44 = arith.select %42, %40, %43 : vector<8x256xi1>, vector<8x256xf32>
    %c24 = arith.constant 24 : index
    %c0_20 = arith.constant 0 : index
    %45 = vector.load %arg6[%c24, %c0_20] : memref<72x256xf32, #tpu.memory_space<vmem>>, vector<8x256xf32>
    tpu.vector_store %arg6[%c24, %c0_20], %44 {strides = array<i32>} : memref<72x256xf32, #tpu.memory_space<vmem>>, vector<8x256xf32>,
    %c0_21 = arith.constant 0 : index
    %c128_22 = arith.constant 128 : index
    %46 = vector.load %arg5[%c0_21, %c128_22] : memref<8x512xf32, #tpu.memory_space<vmem>>, vector<8x256xf32>
    %c32 = arith.constant 32 : index
    %c0_23 = arith.constant 0 : index
    %47 = vector.load %arg6[%c32, %c0_23] : memref<72x256xf32, #tpu.memory_space<vmem>>, vector<8x256xf32>
    tpu.vector_store %arg6[%c32, %c0_23], %46 {strides = array<i32>} : memref<72x256xf32, #tpu.memory_space<vmem>>, vector<8x256xf32>,
    %c0_24 = arith.constant 0 : index
    %c129 = arith.constant 129 : index
    %48 = vector.load %arg5[%c0_24, %c129] : memref<8x512xf32, #tpu.memory_space<vmem>>, vector<8x256xf32>
    %cst_25 = arith.constant 0.000000e+00 : f32
    %49 = vector.shape_cast %25 : vector<1x256xi1> to vector<1x256xi1>
    %50 = vector.broadcast %49 : vector<1x256xi1> to vector<8x256xi1>
    %51 = vector.broadcast %cst_25 : f32 to vector<8x256xf32>
    %52 = arith.select %50, %48, %51 : vector<8x256xi1>, vector<8x256xf32>
    %c40 = arith.constant 40 : index
    %c0_26 = arith.constant 0 : index
    %53 = vector.load %arg6[%c40, %c0_26] : memref<72x256xf32, #tpu.memory_space<vmem>>, vector<8x256xf32>
    tpu.vector_store %arg6[%c40, %c0_26], %52 {strides = array<i32>} : memref<72x256xf32, #tpu.memory_space<vmem>>, vector<8x256xf32>,
    %c0_27 = arith.constant 0 : index
    %c143 = arith.constant 143 : index
    %54 = vector.load %arg5[%c0_27, %c143] : memref<8x512xf32, #tpu.memory_space<vmem>>, vector<8x256xf32>
    %cst_28 = arith.constant 0.000000e+00 : f32
    %55 = vector.shape_cast %23 : vector<1x256xi1> to vector<1x256xi1>
    %56 = vector.broadcast %55 : vector<1x256xi1> to vector<8x256xi1>
    %57 = vector.broadcast %cst_28 : f32 to vector<8x256xf32>
    %58 = arith.select %56, %54, %57 : vector<8x256xi1>, vector<8x256xf32>
    %c48 = arith.constant 48 : index
    %c0_29 = arith.constant 0 : index
    %59 = vector.load %arg6[%c48, %c0_29] : memref<72x256xf32, #tpu.memory_space<vmem>>, vector<8x256xf32>
    tpu.vector_store %arg6[%c48, %c0_29], %58 {strides = array<i32>} : memref<72x256xf32, #tpu.memory_space<vmem>>, vector<8x256xf32>,
    %c0_30 = arith.constant 0 : index
    %c144 = arith.constant 144 : index
    %60 = vector.load %arg5[%c0_30, %c144] : memref<8x512xf32, #tpu.memory_space<vmem>>, vector<8x256xf32>
    %c56 = arith.constant 56 : index
    %c0_31 = arith.constant 0 : index
    %61 = vector.load %arg6[%c56, %c0_31] : memref<72x256xf32, #tpu.memory_space<vmem>>, vector<8x256xf32>
    tpu.vector_store %arg6[%c56, %c0_31], %60 {strides = array<i32>} : memref<72x256xf32, #tpu.memory_space<vmem>>, vector<8x256xf32>,
    %c0_32 = arith.constant 0 : index
    %c145 = arith.constant 145 : index
    %62 = vector.load %arg5[%c0_32, %c145] : memref<8x512xf32, #tpu.memory_space<vmem>>, vector<8x256xf32>
    %cst_33 = arith.constant 0.000000e+00 : f32
    %63 = vector.shape_cast %25 : vector<1x256xi1> to vector<1x256xi1>
    %64 = vector.broadcast %63 : vector<1x256xi1> to vector<8x256xi1>
    %65 = vector.broadcast %cst_33 : f32 to vector<8x256xf32>
    %66 = arith.select %64, %62, %65 : vector<8x256xi1>, vector<8x256xf32>
    %c64 = arith.constant 64 : index
    %c0_34 = arith.constant 0 : index
    %67 = vector.load %arg6[%c64, %c0_34] : memref<72x256xf32, #tpu.memory_space<vmem>>, vector<8x256xf32>
    tpu.vector_store %arg6[%c64, %c0_34], %66 {strides = array<i32>} : memref<72x256xf32, #tpu.memory_space<vmem>>, vector<8x256xf32>,
    %c0_35 = arith.constant 0 : index
    %c0_36 = arith.constant 0 : index
    %c0_37 = arith.constant 0 : index
    %68 = vector.load %arg2[%c0_35, %c0_36, %c0_37] : memref<2x8x72xf32, #tpu.memory_space<vmem>>, vector<1x8x72xf32>
    %69 = vector.shape_cast %68 : vector<1x8x72xf32> to vector<8x72xf32>
    %c0_38 = arith.constant 0 : index
    %c0_39 = arith.constant 0 : index
    %70 = vector.load %arg6[%c0_38, %c0_39] : memref<72x256xf32, #tpu.memory_space<vmem>>, vector<72x256xf32>
    %cst_40 = arith.constant dense<0.000000e+00> : vector<8x256xf32>
    %71 = tpu.matmul %69, %70, %cst_40 {dimension_numbers = #tpu.dot_dimension_numbers<[1], [0], [0], [1], [0, 0, 1, 1], [], []>} : vector<8x72xf32>, vector<72x256xf32>, vector<8x256xf32> -> vector<8x256xf32>
    %c0_41 = arith.constant 0 : index
    %c0_42 = arith.constant 0 : index
    %c0_43 = arith.constant 0 : index
    %72 = vector.load %arg3[%c0_41, %c0_42, %c0_43] : memref<2x8x1xf32, #tpu.memory_space<vmem>>, vector<1x8x1xf32>
    %73 = vector.shape_cast %72 : vector<1x8x1xf32> to vector<8x1xf32>
    %74 = vector.broadcast %73 : vector<8x1xf32> to vector<8x256xf32>
    %75 = arith.addf %71, %74 : vector<8x256xf32>
    %cst_44 = arith.constant 0.000000e+00 : f32
    %76 = vector.broadcast %cst_44 : f32 to vector<8x256xf32>
    %77 = arith.maximumf %75, %76 : vector<8x256xf32>
    %c0_45 = arith.constant 0 : index
    %c128_46 = arith.constant 128 : index
    %78 = vector.load %arg5[%c0_45, %c128_46] : memref<8x512xf32, #tpu.memory_space<vmem>>, vector<8x256xf32>
    tpu.vector_store %arg5[%c0_45, %c128_46], %77 {strides = array<i32>} : memref<8x512xf32, #tpu.memory_space<vmem>>, vector<8x256xf32>,
    %c0_47 = arith.constant 0 : index
    %c111_48 = arith.constant 111 : index
    %79 = vector.load %arg5[%c0_47, %c111_48] : memref<8x512xf32, #tpu.memory_space<vmem>>, vector<8x256xf32>
    %cst_49 = arith.constant 0.000000e+00 : f32
    %80 = vector.shape_cast %23 : vector<1x256xi1> to vector<1x256xi1>
    %81 = vector.broadcast %80 : vector<1x256xi1> to vector<8x256xi1>
    %82 = vector.broadcast %cst_49 : f32 to vector<8x256xf32>
    %83 = arith.select %81, %79, %82 : vector<8x256xi1>, vector<8x256xf32>
    %c0_50 = arith.constant 0 : index
    %c0_51 = arith.constant 0 : index
    %84 = vector.load %arg6[%c0_50, %c0_51] : memref<72x256xf32, #tpu.memory_space<vmem>>, vector<8x256xf32>
    tpu.vector_store %arg6[%c0_50, %c0_51], %83 {strides = array<i32>} : memref<72x256xf32, #tpu.memory_space<vmem>>, vector<8x256xf32>,
    %c0_52 = arith.constant 0 : index
    %c112_53 = arith.constant 112 : index
    %85 = vector.load %arg5[%c0_52, %c112_53] : memref<8x512xf32, #tpu.memory_space<vmem>>, vector<8x256xf32>
    %c8_54 = arith.constant 8 : index
    %c0_55 = arith.constant 0 : index
    %86 = vector.load %arg6[%c8_54, %c0_55] : memref<72x256xf32, #tpu.memory_space<vmem>>, vector<8x256xf32>
    tpu.vector_store %arg6[%c8_54, %c0_55], %85 {strides = array<i32>} : memref<72x256xf32, #tpu.memory_space<vmem>>, vector<8x256xf32>,
    %c0_56 = arith.constant 0 : index
    %c113_57 = arith.constant 113 : index
    %87 = vector.load %arg5[%c0_56, %c113_57] : memref<8x512xf32, #tpu.memory_space<vmem>>, vector<8x256xf32>
    %cst_58 = arith.constant 0.000000e+00 : f32
    %88 = vector.shape_cast %25 : vector<1x256xi1> to vector<1x256xi1>
    %89 = vector.broadcast %88 : vector<1x256xi1> to vector<8x256xi1>
    %90 = vector.broadcast %cst_58 : f32 to vector<8x256xf32>
    %91 = arith.select %89, %87, %90 : vector<8x256xi1>, vector<8x256xf32>
    %c16_59 = arith.constant 16 : index
    %c0_60 = arith.constant 0 : index
    %92 = vector.load %arg6[%c16_59, %c0_60] : memref<72x256xf32, #tpu.memory_space<vmem>>, vector<8x256xf32>
    tpu.vector_store %arg6[%c16_59, %c0_60], %91 {strides = array<i32>} : memref<72x256xf32, #tpu.memory_space<vmem>>, vector<8x256xf32>,
    %c0_61 = arith.constant 0 : index
    %c127_62 = arith.constant 127 : index
    %93 = vector.load %arg5[%c0_61, %c127_62] : memref<8x512xf32, #tpu.memory_space<vmem>>, vector<8x256xf32>
    %cst_63 = arith.constant 0.000000e+00 : f32
    %94 = vector.shape_cast %23 : vector<1x256xi1> to vector<1x256xi1>
    %95 = vector.broadcast %94 : vector<1x256xi1> to vector<8x256xi1>
    %96 = vector.broadcast %cst_63 : f32 to vector<8x256xf32>
    %97 = arith.select %95, %93, %96 : vector<8x256xi1>, vector<8x256xf32>
    %c24_64 = arith.constant 24 : index
    %c0_65 = arith.constant 0 : index
    %98 = vector.load %arg6[%c24_64, %c0_65] : memref<72x256xf32, #tpu.memory_space<vmem>>, vector<8x256xf32>
    tpu.vector_store %arg6[%c24_64, %c0_65], %97 {strides = array<i32>} : memref<72x256xf32, #tpu.memory_space<vmem>>, vector<8x256xf32>,
    %c0_66 = arith.constant 0 : index
    %c128_67 = arith.constant 128 : index
    %99 = vector.load %arg5[%c0_66, %c128_67] : memref<8x512xf32, #tpu.memory_space<vmem>>, vector<8x256xf32>
    %c32_68 = arith.constant 32 : index
    %c0_69 = arith.constant 0 : index
    %100 = vector.load %arg6[%c32_68, %c0_69] : memref<72x256xf32, #tpu.memory_space<vmem>>, vector<8x256xf32>
    tpu.vector_store %arg6[%c32_68, %c0_69], %99 {strides = array<i32>} : memref<72x256xf32, #tpu.memory_space<vmem>>, vector<8x256xf32>,
    %c0_70 = arith.constant 0 : index
    %c129_71 = arith.constant 129 : index
    %101 = vector.load %arg5[%c0_70, %c129_71] : memref<8x512xf32, #tpu.memory_space<vmem>>, vector<8x256xf32>
    %cst_72 = arith.constant 0.000000e+00 : f32
    %102 = vector.shape_cast %25 : vector<1x256xi1> to vector<1x256xi1>
    %103 = vector.broadcast %102 : vector<1x256xi1> to vector<8x256xi1>
    %104 = vector.broadcast %cst_72 : f32 to vector<8x256xf32>
    %105 = arith.select %103, %101, %104 : vector<8x256xi1>, vector<8x256xf32>
    %c40_73 = arith.constant 40 : index
    %c0_74 = arith.constant 0 : index
    %106 = vector.load %arg6[%c40_73, %c0_74] : memref<72x256xf32, #tpu.memory_space<vmem>>, vector<8x256xf32>
    tpu.vector_store %arg6[%c40_73, %c0_74], %105 {strides = array<i32>} : memref<72x256xf32, #tpu.memory_space<vmem>>, vector<8x256xf32>,
    %c0_75 = arith.constant 0 : index
    %c143_76 = arith.constant 143 : index
    %107 = vector.load %arg5[%c0_75, %c143_76] : memref<8x512xf32, #tpu.memory_space<vmem>>, vector<8x256xf32>
    %cst_77 = arith.constant 0.000000e+00 : f32
    %108 = vector.shape_cast %23 : vector<1x256xi1> to vector<1x256xi1>
    %109 = vector.broadcast %108 : vector<1x256xi1> to vector<8x256xi1>
    %110 = vector.broadcast %cst_77 : f32 to vector<8x256xf32>
    %111 = arith.select %109, %107, %110 : vector<8x256xi1>, vector<8x256xf32>
    %c48_78 = arith.constant 48 : index
    %c0_79 = arith.constant 0 : index
    %112 = vector.load %arg6[%c48_78, %c0_79] : memref<72x256xf32, #tpu.memory_space<vmem>>, vector<8x256xf32>
    tpu.vector_store %arg6[%c48_78, %c0_79], %111 {strides = array<i32>} : memref<72x256xf32, #tpu.memory_space<vmem>>, vector<8x256xf32>,
    %c0_80 = arith.constant 0 : index
    %c144_81 = arith.constant 144 : index
    %113 = vector.load %arg5[%c0_80, %c144_81] : memref<8x512xf32, #tpu.memory_space<vmem>>, vector<8x256xf32>
    %c56_82 = arith.constant 56 : index
    %c0_83 = arith.constant 0 : index
    %114 = vector.load %arg6[%c56_82, %c0_83] : memref<72x256xf32, #tpu.memory_space<vmem>>, vector<8x256xf32>
    tpu.vector_store %arg6[%c56_82, %c0_83], %113 {strides = array<i32>} : memref<72x256xf32, #tpu.memory_space<vmem>>, vector<8x256xf32>,
    %c0_84 = arith.constant 0 : index
    %c145_85 = arith.constant 145 : index
    %115 = vector.load %arg5[%c0_84, %c145_85] : memref<8x512xf32, #tpu.memory_space<vmem>>, vector<8x256xf32>
    %cst_86 = arith.constant 0.000000e+00 : f32
    %116 = vector.shape_cast %25 : vector<1x256xi1> to vector<1x256xi1>
    %117 = vector.broadcast %116 : vector<1x256xi1> to vector<8x256xi1>
    %118 = vector.broadcast %cst_86 : f32 to vector<8x256xf32>
    %119 = arith.select %117, %115, %118 : vector<8x256xi1>, vector<8x256xf32>
    %c64_87 = arith.constant 64 : index
    %c0_88 = arith.constant 0 : index
    %120 = vector.load %arg6[%c64_87, %c0_88] : memref<72x256xf32, #tpu.memory_space<vmem>>, vector<8x256xf32>
    tpu.vector_store %arg6[%c64_87, %c0_88], %119 {strides = array<i32>} : memref<72x256xf32, #tpu.memory_space<vmem>>, vector<8x256xf32>,
    %c1 = arith.constant 1 : index
    %c0_89 = arith.constant 0 : index
    %c0_90 = arith.constant 0 : index
    %121 = vector.load %arg2[%c1, %c0_89, %c0_90] : memref<2x8x72xf32, #tpu.memory_space<vmem>>, vector<1x8x72xf32>
    %122 = vector.shape_cast %121 : vector<1x8x72xf32> to vector<8x72xf32>
    %c0_91 = arith.constant 0 : index
    %c0_92 = arith.constant 0 : index
    %123 = vector.load %arg6[%c0_91, %c0_92] : memref<72x256xf32, #tpu.memory_space<vmem>>, vector<72x256xf32>
    %cst_93 = arith.constant dense<0.000000e+00> : vector<8x256xf32>
    %124 = tpu.matmul %122, %123, %cst_93 {dimension_numbers = #tpu.dot_dimension_numbers<[1], [0], [0], [1], [0, 0, 1, 1], [], []>} : vector<8x72xf32>, vector<72x256xf32>, vector<8x256xf32> -> vector<8x256xf32>
    %c1_94 = arith.constant 1 : index
    %c0_95 = arith.constant 0 : index
    %c0_96 = arith.constant 0 : index
    %125 = vector.load %arg3[%c1_94, %c0_95, %c0_96] : memref<2x8x1xf32, #tpu.memory_space<vmem>>, vector<1x8x1xf32>
    %126 = vector.shape_cast %125 : vector<1x8x1xf32> to vector<8x1xf32>
    %127 = vector.broadcast %126 : vector<8x1xf32> to vector<8x256xf32>
    %128 = arith.addf %124, %127 : vector<8x256xf32>
    %cst_97 = arith.constant 0.000000e+00 : f32
    %129 = vector.broadcast %cst_97 : f32 to vector<8x256xf32>
    %130 = arith.maximumf %128, %129 : vector<8x256xf32>
    %131 = vector.shape_cast %130 : vector<8x256xf32> to vector<1x8x256xf32>
    %c0_98 = arith.constant 0 : index
    %c0_99 = arith.constant 0 : index
    %c0_100 = arith.constant 0 : index
    %132 = vector.load %arg4[%c0_98, %c0_99, %c0_100] : memref<1x8x256xf32, #tpu.memory_space<vmem>>, vector<1x8x256xf32>
    tpu.vector_store %arg4[%c0_98, %c0_99, %c0_100], %131 {strides = array<i32>} : memref<1x8x256xf32, #tpu.memory_space<vmem>>, vector<1x8x256xf32>,
    return
  }
  func.func @transform_0(%arg0: i32) -> (i32, i32, i32) {
    %c0_i32 = arith.constant 0 : i32
    %c0_i32_0 = arith.constant 0 : i32
    %c0_i32_1 = arith.constant 0 : i32
    return %arg0, %c0_i32, %c0_i32_0 : i32, i32, i32
  }
  func.func @transform_1(%arg0: i32) -> (i32, i32, i32) {
    %c0_i32 = arith.constant 0 : i32
    %c0_i32_0 = arith.constant 0 : i32
    %c0_i32_1 = arith.constant 0 : i32
    %c0_i32_2 = arith.constant 0 : i32
    return %c0_i32, %c0_i32_0, %c0_i32_1 : i32, i32, i32
  }
  func.func @transform_2(%arg0: i32) -> (i32, i32, i32) {
    %c0_i32 = arith.constant 0 : i32
    %c0_i32_0 = arith.constant 0 : i32
    %c0_i32_1 = arith.constant 0 : i32
    %c0_i32_2 = arith.constant 0 : i32
    return %c0_i32, %c0_i32_0, %c0_i32_1 : i32, i32, i32
  }
  func.func @transform_3(%arg0: i32) -> (i32, i32, i32) {
    %c0_i32 = arith.constant 0 : i32
    %c0_i32_0 = arith.constant 0 : i32
    %c0_i32_1 = arith.constant 0 : i32
    return %arg0, %c0_i32, %c0_i32_0 : i32, i32, i32
  }
}

</mosaic_0001>

<llo_original>
// kernel: tpu_custom_call.1
$region0: #{tpu_custom_call.1}
  #allocation0 [shape = 'u32[]', space=smem, size = 0x4, offset = 0x4, fixed_abs, tag = 'smem constant byte address 0x4 - core index']
  #allocation1 [shape = 'u32[144,128]{1,0:T(1,128)}', space=vmem, size = 0x12000, scoped, tag = 'internal scratch']
  #allocation2 [shape = 'f32[8,512]{1,0:T(8,128)}', space=vmem, size = 0x4000, scoped, tag = 'scratch operand']
  #allocation3 [shape = 'f32[72,256]{1,0:T(8,128)}', space=vmem, size = 0x12000, scoped, tag = 'scratch operand']
  %s0 = inlined_call_operand.vmem [shape: f32[2,4,256], index: 0, kind: input, shape index: {}]
  %s1 = inlined_call_operand.hbm [shape: f32[2,8,72], index: 1, kind: input, shape index: {}]
  %s2 = inlined_call_operand.vmem [shape: f32[2,8,1], index: 2, kind: input, shape index: {}]
  %s3 = inlined_call_operand.hbm [shape: f32[2,8,256], index: 3, kind: output, shape index: {}]
  %s4 = sld [smem:[#allocation0]]
  $region49: #{tpu_custom_call.1} parent=0
    _
  %s6 = ssub.s32 1, %s4
  %s7 = scalar_select 0, %s6, %s4
  $region1: #{tpu_custom_call.1} parent=0
    #allocation4 [shape = 'u8[8192]{0}', space=vmem, size = 0x2000, scoped, tag = 'input window, operand 1, single buffered']
    #allocation5 [shape = 's32[2]{0}', space=sflag, size = 0x8, scoped, tag = 'scoped memory for tpu_custom_call.1']
    #allocation6 [shape = 's32[2]{0}', space=sflag, size = 0x8, scoped, tag = 'scoped memory for tpu_custom_call.1']
    #allocation7 [shape = 'u8[16384]{0}', space=vmem, size = 0x4000, scoped, tag = 'output window, operand 0']
    %8 = vsyncpa [#allocation5], 0
    %9 = vsyncpa [#allocation6], 0
    %s10 = scalar_lea.sflag [#allocation6], 1
    %11 = vsyncpa %s10, 0
    loop: start=0, step=1, limit=4
    $region2: #{tpu_custom_call.1} parent=1 // loop_pre_header
      _
    $region3: #{tpu_custom_call.1} parent=1 // loop_header
      %s13 = sphi 0, %s17
      %p14 = scmp.ge.s32.totalorder %s13, 4
      %s23 = sphi 0, %s25
      %s26 = sphi 0, %s23
      %s27 = sphi 0, %s26
      %s43 = sphi 0, %s27
      %s47 = sphi 0, %s47
      %s49 = sphi 0, %s47
      %s50 = sphi 0, %s49
      %s64 = sphi 0, %s50
      %s68 = sphi 0, %s68
      %s70 = sphi 0, %s68
      %s71 = sphi 0, %s70
      %s85 = sphi 0, %s71
      %s91 = sphi 0, %s93
      %s94 = sphi 0, %s91
      %s95 = sphi 0, %s94
      %s111 = sphi 0, %s95
    $region4: #{tpu_custom_call.1} parent=1 // loop_header_branch
      %16 = sbr.rel (%p14) target = $region8
    $region5: #{tpu_custom_call.1} parent=1 // loop_body
      %s18 = ssub.s32 %s13, 1
      %s19 = ssub.s32 %s13, 2
      %s20 = sadd.s32 %s13, 1
      %s21 = ssub.s32 %s13, %s20
      %p22 = scmp.eq.s32.totalorder %s21, 0
      %s24 = sadd.s32 %s23, 1
      %s25 = scalar_select %p22, %s23, %s24
      %p28 = pneg %p22
      %p29 = scmp.eq.s32.totalorder %s13, 1
      %p30 = por %p28, %p29
      %p31 = scmp.ne.s32.totalorder %s23, %s26
      %p32 = scmp.eq.s32.totalorder %s13, 0
      %p33 = por %p31, %p32
      %p34 = scmp.ne.s32.totalorder %s23, %s26
      %p35 = scmp.eq.s32.totalorder %s18, 1
      %p36 = por %p34, %p35
      %p37 = scmp.ne.s32.totalorder %s26, %s27
      %p38 = scmp.eq.s32.totalorder %s18, 0
      %p39 = por %p37, %p38
      %p40 = scmp.ne.s32.totalorder %s26, %s27
      %p41 = scmp.eq.s32.totalorder %s19, 1
      %p42 = por %p40, %p41
      %p44 = scmp.ne.s32.totalorder %s27, %s43
      %p45 = scmp.eq.s32.totalorder %s19, 0
      %p46 = por %p44, %p45
      %s48 = sadd.s32 %s47, 1
      %p51 = scmp.eq.s32.totalorder %s13, 1
      %p52 = scmp.ne.s32.totalorder %s47, %s49
      %p53 = scmp.eq.s32.totalorder %s13, 0
      %p54 = por %p52, %p53
      %p55 = scmp.ne.s32.totalorder %s47, %s49
      %p56 = scmp.eq.s32.totalorder %s18, 1
      %p57 = por %p55, %p56
      %p58 = scmp.ne.s32.totalorder %s49, %s50
      %p59 = scmp.eq.s32.totalorder %s18, 0
      %p60 = por %p58, %p59
      %p61 = scmp.ne.s32.totalorder %s49, %s50
      %p62 = scmp.eq.s32.totalorder %s19, 1
      %p63 = por %p61, %p62
      %p65 = scmp.ne.s32.totalorder %s50, %s64
      %p66 = scmp.eq.s32.totalorder %s19, 0
      %p67 = por %p65, %p66
      %s69 = sadd.s32 %s68, 1
      %p72 = scmp.eq.s32.totalorder %s13, 1
      %p73 = scmp.ne.s32.totalorder %s68, %s70
      %p74 = scmp.eq.s32.totalorder %s13, 0
      %p75 = por %p73, %p74
      %p76 = scmp.ne.s32.totalorder %s68, %s70
      %p77 = scmp.eq.s32.totalorder %s18, 1
      %p78 = por %p76, %p77
      %p79 = scmp.ne.s32.totalorder %s70, %s71
      %p80 = scmp.eq.s32.totalorder %s18, 0
      %p81 = por %p79, %p80
      %p82 = scmp.ne.s32.totalorder %s70, %s71
      %p83 = scmp.eq.s32.totalorder %s19, 1
      %p84 = por %p82, %p83
      %p86 = scmp.ne.s32.totalorder %s71, %s85
      %p87 = scmp.eq.s32.totalorder %s19, 0
      %p88 = por %p86, %p87
      %s89 = ssub.s32 %s13, %s20
      %p90 = scmp.eq.s32.totalorder %s89, 0
      %s92 = sadd.s32 %s91, 1
      %s93 = scalar_select %p90, %s91, %s92
      %p96 = pneg %p90
      %p97 = scmp.eq.s32.totalorder %s13, 1
      %p98 = por %p96, %p97
      %p99 = scmp.ne.s32.totalorder %s91, %s94
      %p100 = scmp.eq.s32.totalorder %s13, 0
      %p101 = por %p99, %p100
      %p102 = scmp.ne.s32.totalorder %s91, %s94
      %p103 = scmp.eq.s32.totalorder %s18, 1
      %p104 = por %p102, %p103
      %p105 = scmp.ne.s32.totalorder %s94, %s95
      %p106 = scmp.eq.s32.totalorder %s18, 0
      %p107 = por %p105, %p106
      %p108 = scmp.ne.s32.totalorder %s94, %s95
      %p109 = scmp.eq.s32.totalorder %s19, 1
      %p110 = por %p108, %p109
      %p112 = scmp.ne.s32.totalorder %s95, %s111
      %p113 = scmp.eq.s32.totalorder %s19, 0
      %p114 = por %p112, %p113
      %p115 = scmp.le.s32.totalorder 1, %s13
      %p116 = scmp.lt.s32.totalorder %s13, 3
      %p117 = pnand %p115, %p116
      %p118 = pneg %p117
      // Predicated region
      $region9: #{tpu_custom_call.1} parent=5 // pred_check
        _
      $region10: #{tpu_custom_call.1} parent=5 // pred_check_branch
        %120 = sbr.rel (%p117) target = $region12
      $region11: #{tpu_custom_call.1} parent=5 // pred_region
        %s121 = ssub.s32 %s13, 1
        // Predicated region
        $region13: #{tpu_custom_call.1} parent=11 // pred_check
          %p122 = pneg %p60
        $region14: #{tpu_custom_call.1} parent=11 // pred_check_branch
          %124 = sbr.rel (%p122) target = $region16
        $region15: #{tpu_custom_call.1} parent=11 // pred_region
          %s126 = ssub.s32 256, 256
          %127 = vsyncadd [#allocation5], %s126
          %s128 = sshll.u32 [#allocation4], 4
          %s129 = int_to_ptr.vmem [resolvable:$true] %s128
          %134 = dma.hbm_to_vmem [thread:$0]  %s1, 256, %s129, [#allocation5], 128, 128, 8
        $region16: #{tpu_custom_call.1} parent=11 // pred_fallthru
          _
        // Predicated region
        $region17: #{tpu_custom_call.1} parent=11 // pred_check
          %p135 = pneg %p81
        $region18: #{tpu_custom_call.1} parent=11 // pred_check_branch
          %137 = sbr.rel (%p135) target = $region20
        $region19: #{tpu_custom_call.1} parent=11 // pred_region
          _
        $region20: #{tpu_custom_call.1} parent=11 // pred_fallthru
          _
      $region12: #{tpu_custom_call.1} parent=5 // pred_fallthru
        _
      %p138 = scmp.lt.s32.totalorder %s13, 2
      // Predicated region
      $region21: #{tpu_custom_call.1} parent=5 // pred_check
        %p139 = pneg %p138
      $region22: #{tpu_custom_call.1} parent=5 // pred_check_branch
        %141 = sbr.rel (%p139) target = $region24
      $region23: #{tpu_custom_call.1} parent=5 // pred_region
        // Predicated region
        $region25: #{tpu_custom_call.1} parent=23 // pred_check
          %p142 = pneg %p33
        $region26: #{tpu_custom_call.1} parent=23 // pred_check_branch
          %144 = sbr.rel (%p142) target = $region28
        $region27: #{tpu_custom_call.1} parent=23 // pred_region
          %p145 = scmp.lt.s32.totalorder %s13, 1
          %s146 = scalar_select %p145, %s13, 1
          %s147 = smul.addr %s146, 2
          %s148 = smul.addr %s147, 4
          %s149 = scalar_lea.vmem %s0, %s148
        $region28: #{tpu_custom_call.1} parent=23 // pred_fallthru
          _
      $region24: #{tpu_custom_call.1} parent=5 // pred_fallthru
        _
      %p150 = scmp.le.s32.totalorder 1, %s13
      %p151 = scmp.lt.s32.totalorder %s13, 3
      %p152 = pnand %p150, %p151
      %p153 = pneg %p152
      // Predicated region
      $region29: #{tpu_custom_call.1} parent=5 // pred_check
        _
      $region30: #{tpu_custom_call.1} parent=5 // pred_check_branch
        %155 = sbr.rel (%p152) target = $region32
      $region31: #{tpu_custom_call.1} parent=5 // pred_region
        %s156 = ssub.s32 %s13, 1
        // Predicated region
        $region33: #{tpu_custom_call.1} parent=31 // pred_check
          %p157 = pneg %p60
        $region34: #{tpu_custom_call.1} parent=31 // pred_check_branch
          %159 = sbr.rel (%p157) target = $region36
        $region35: #{tpu_custom_call.1} parent=31 // pred_region
          %160 = dma.done [#allocation5], 256
        $region36: #{tpu_custom_call.1} parent=31 // pred_fallthru
          _
        %p161 = scmp.lt.s32.totalorder %s18, 1
        %s162 = scalar_select %p161, %s18, 1
        %s163 = smul.addr %s162, 2
        %s164 = smul.addr %s163, 4
        %s165 = scalar_lea.vmem %s0, %s164
        %p166 = pneg %p39
        %p167 = pneg %p36
        %p168 = pneg %p60
        %p169 = pneg %p57
        %p170 = pneg %p81
        %p171 = pneg %p78
        %p172 = pneg %p107
        %p173 = pneg %p104
        %s174 = sand.u32 %s94, 1
        %s175 = scalar_lea.sflag [#allocation6], %s174
        %s176 = sand.u32 %s94, 1
        %s177 = smul.addr %s176, 16
        %s178 = scalar_lea.vmem [#allocation7], %s177
        %p179 = scmp.lt.s32.totalorder %s18, 1
        %s180 = scalar_select %p179, %s18, 1
        %s181 = smul.addr %s180, 2
        %s182 = smul.addr %s181, 4
        %s183 = scalar_lea.vmem %s0, %s182
        %184 = vst [vmem:[#allocation2] sm:$0xff] 0.0
        %185 = vst [vmem:[#allocation2 + $0x8] sm:$0xff] 0.0
        %186 = vst [vmem:[#allocation2 + $0x10] sm:$0xff] 0.0
        %187 = vst [vmem:[#allocation2 + $0x18] sm:$0xff] 0.0
        %v188 = vld [vmem:[%s183] sm:$0xff]
        %v190 = vcombine.high %v188, %v188
        %192 = vst [vmem:[#allocation2 + $0x8] sm:$0xf] %v188
        %193 = vst [vmem:[#allocation2 + $0x10] sm:$0xf] %v190
        %v194 = vlaneseq
        %v195 = vand.u32 %v194, 127
        %v196 = vadd.s32 %v195, 128
        %vm197 = vcmp.lt.s32.totalorder %v195, 0
        %v198 = vsub.s32 0, %v195
        %v199 = vsel %vm197, %v198, %v195
        %v200 = vshrl.u32 %v199, 4
        %v201 = vand.u32 %v199, 15
        %v202 = vsub.s32 0, %v201
        %v203 = vsel %vm197, %v202, %v201
        %vm204 = vcmp.lt.s32.totalorder %v196, 0
        %v205 = vsub.s32 0, %v196
        %v206 = vsel %vm204, %v205, %v196
        %v207 = vshrl.u32 %v206, 4
        %v208 = vand.u32 %v206, 15
        %v209 = vsub.s32 0, %v208
        %v210 = vsel %vm204, %v209, %v208
        %vm211 = vcmp.ne.s32.totalorder %v203, 0
        %vm212 = vcmp.ne.s32.totalorder %v210, 0
        %vm213 = vcmp.lt.s32.totalorder %v203, 0
        %vm214 = vcmp.lt.s32.totalorder %v210, 0
        %vm215 = vmand %vm213, %vm211
        %vm216 = vmand %vm214, %vm212
        %v217 = vadd.s32 %v203, 16
        %v218 = vadd.s32 %v210, 16
        %v219 = vsel %vm215, %v217, %v203
        %v220 = vsel %vm216, %v218, %v210
        %vm221 = vcmp.ge.s32.totalorder %v219, 1
        %vm222 = vcmp.ge.s32.totalorder %v220, 1
        %vm223 = vcmp.lt.s32.totalorder %v219, 15
        %vm224 = vcmp.lt.s32.totalorder %v220, 15
        %v225 = vld [vmem:[#allocation2] sm:$0xff]
        %v226 = vld [vmem:[#allocation2 + $0x8] sm:$0xff]
        %v227 = vld [vmem:[#allocation2 + $0x10] sm:$0xff]
        %v228 = vsel %vm221, 1, 0
        %v229 = vsel %vm222, 1, 0
        %vm230 = vcmp.eq.s32.totalorder %v228, 1
        %vm231 = vcmp.eq.s32.totalorder %v229, 1
        %235 = vrot.lane.b32.xlu0 %v225, 17
        %v236 = vpop.permute.xlu0 %235
        %237 = vrot.lane.b32.xlu0 %v226, 17
        %v238 = vpop.permute.xlu0 %237
        %239 = vrot.lane.b32.xlu0 %v227, 17
        %v240 = vpop.permute.xlu0 %239
        %vm241 = vcmask 138240
        %v242 = vsel %vm241, %v236, %v238
        %v243 = vsel %vm241, %v238, %v240
        %v246 = vsel %vm230, %v242, 0.0
        %v247 = vsel %vm231, %v243, 0.0
        %248 = vst [vmem:[#allocation3] sm:$0xff] %v246
        %249 = vst [vmem:[#allocation3 + $0x8] sm:$0xff] %v247
        %v250 = vld [vmem:[#allocation2] sm:$0xff]
        %v251 = vld [vmem:[#allocation2 + $0x8] sm:$0xff]
        %v252 = vld [vmem:[#allocation2 + $0x10] sm:$0xff]
        %256 = vrot.lane.b32.xlu0 %v250, 16
        %v257 = vpop.permute.xlu0 %256
        %258 = vrot.lane.b32.xlu0 %v251, 16
        %v259 = vpop.permute.xlu0 %258
        %260 = vrot.lane.b32.xlu0 %v252, 16
        %v261 = vpop.permute.xlu0 %260
        %vm262 = vcmask 130048
        %v263 = vsel %vm262, %v257, %v259
        %v264 = vsel %vm262, %v259, %v261
        %267 = vst [vmem:[#allocation3 + $0x10] sm:$0xff] %v263
        %268 = vst [vmem:[#allocation3 + $0x18] sm:$0xff] %v264
        %v269 = vld [vmem:[#allocation2] sm:$0xff]
        %v270 = vld [vmem:[#allocation2 + $0x8] sm:$0xff]
        %v271 = vld [vmem:[#allocation2 + $0x10] sm:$0xff]
        %v272 = vsel %vm223, 1, 0
        %v273 = vsel %vm224, 1, 0
        %vm274 = vcmp.eq.s32.totalorder %v272, 1
        %vm275 = vcmp.eq.s32.totalorder %v273, 1
        %279 = vrot.lane.b32.xlu0 %v269, 15
        %v280 = vpop.permute.xlu0 %279
        %281 = vrot.lane.b32.xlu0 %v270, 15
        %v282 = vpop.permute.xlu0 %281
        %283 = vrot.lane.b32.xlu0 %v271, 15
        %v284 = vpop.permute.xlu0 %283
        %vm285 = vcmask 121856
        %v286 = vsel %vm285, %v280, %v282
        %v287 = vsel %vm285, %v282, %v284
        %v290 = vsel %vm274, %v286, 0.0
        %v291 = vsel %vm275, %v287, 0.0
        %292 = vst [vmem:[#allocation3 + $0x20] sm:$0xff] %v290
        %293 = vst [vmem:[#allocation3 + $0x28] sm:$0xff] %v291
        %v294 = vld [vmem:[#allocation2] sm:$0xff]
        %v295 = vld [vmem:[#allocation2 + $0x8] sm:$0xff]
        %v296 = vld [vmem:[#allocation2 + $0x10] sm:$0xff]
        %300 = vrot.lane.b32.xlu0 %v294, 1
        %v301 = vpop.permute.xlu0 %300
        %302 = vrot.lane.b32.xlu0 %v295, 1
        %v303 = vpop.permute.xlu0 %302
        %304 = vrot.lane.b32.xlu0 %v296, 1
        %v305 = vpop.permute.xlu0 %304
        %vm306 = vcmask 7168
        %v307 = vsel %vm306, %v301, %v303
        %v308 = vsel %vm306, %v303, %v305
        %v311 = vsel %vm230, %v307, 0.0
        %v312 = vsel %vm231, %v308, 0.0
        %313 = vst [vmem:[#allocation3 + $0x30] sm:$0xff] %v311
        %314 = vst [vmem:[#allocation3 + $0x38] sm:$0xff] %v312
        %v315 = vld [vmem:[#allocation2 + $0x8] sm:$0xff]
        %v316 = vld [vmem:[#allocation2 + $0x10] sm:$0xff]
        %317 = vst [vmem:[#allocation3 + $0x40] sm:$0xff] %v315
        %318 = vst [vmem:[#allocation3 + $0x48] sm:$0xff] %v316
        %v319 = vld [vmem:[#allocation2 + $0x8] sm:$0xff]
        %v320 = vld [vmem:[#allocation2 + $0x10] sm:$0xff]
        %v321 = vld [vmem:[#allocation2 + $0x18] sm:$0xff]
        %325 = vrot.lane.b32.xlu0 %v319, 127
        %v326 = vpop.permute.xlu0 %325
        %327 = vrot.lane.b32.xlu0 %v320, 127
        %v328 = vpop.permute.xlu0 %327
        %329 = vrot.lane.b32.xlu0 %v321, 127
        %v330 = vpop.permute.xlu0 %329
        %vm331 = vcmask 1039360
        %v332 = vsel %vm331, %v326, %v328
        %v333 = vsel %vm331, %v328, %v330
        %v336 = vsel %vm274, %v332, 0.0
        %v337 = vsel %vm275, %v333, 0.0
        %338 = vst [vmem:[#allocation3 + $0x50] sm:$0xff] %v336
        %339 = vst [vmem:[#allocation3 + $0x58] sm:$0xff] %v337
        %v340 = vld [vmem:[#allocation2 + $0x8] sm:$0xff]
        %v341 = vld [vmem:[#allocation2 + $0x10] sm:$0xff]
        %v342 = vld [vmem:[#allocation2 + $0x18] sm:$0xff]
        %346 = vrot.lane.b32.xlu0 %v340, 113
        %v347 = vpop.permute.xlu0 %346
        %348 = vrot.lane.b32.xlu0 %v341, 113
        %v349 = vpop.permute.xlu0 %348
        %350 = vrot.lane.b32.xlu0 %v342, 113
        %v351 = vpop.permute.xlu0 %350
        %vm352 = vcmask 924672
        %v353 = vsel %vm352, %v347, %v349
        %v354 = vsel %vm352, %v349, %v351
        %v357 = vsel %vm230, %v353, 0.0
        %v358 = vsel %vm231, %v354, 0.0
        %359 = vst [vmem:[#allocation3 + $0x60] sm:$0xff] %v357
        %360 = vst [vmem:[#allocation3 + $0x68] sm:$0xff] %v358
        %v361 = vld [vmem:[#allocation2 + $0x8] sm:$0xff]
        %v362 = vld [vmem:[#allocation2 + $0x10] sm:$0xff]
        %v363 = vld [vmem:[#allocation2 + $0x18] sm:$0xff]
        %367 = vrot.lane.b32.xlu0 %v361, 112
        %v368 = vpop.permute.xlu0 %367
        %369 = vrot.lane.b32.xlu0 %v362, 112
        %v370 = vpop.permute.xlu0 %369
        %371 = vrot.lane.b32.xlu0 %v363, 112
        %v372 = vpop.permute.xlu0 %371
        %vm373 = vcmask 916480
        %v374 = vsel %vm373, %v368, %v370
        %v375 = vsel %vm373, %v370, %v372
        %378 = vst [vmem:[#allocation3 + $0x70] sm:$0xff] %v374
        %379 = vst [vmem:[#allocation3 + $0x78] sm:$0xff] %v375
        %v380 = vld [vmem:[#allocation2 + $0x8] sm:$0xff]
        %v381 = vld [vmem:[#allocation2 + $0x10] sm:$0xff]
        %v382 = vld [vmem:[#allocation2 + $0x18] sm:$0xff]
        %386 = vrot.lane.b32.xlu0 %v380, 111
        %v387 = vpop.permute.xlu0 %386
        %388 = vrot.lane.b32.xlu0 %v381, 111
        %v389 = vpop.permute.xlu0 %388
        %390 = vrot.lane.b32.xlu0 %v382, 111
        %v391 = vpop.permute.xlu0 %390
        %vm392 = vcmask 908288
        %v393 = vsel %vm392, %v387, %v389
        %v394 = vsel %vm392, %v389, %v391
        %v397 = vsel %vm274, %v393, 0.0
        %v398 = vsel %vm275, %v394, 0.0
        %399 = vst [vmem:[#allocation3 + $0x80] sm:$0xff] %v397
        %400 = vst [vmem:[#allocation3 + $0x88] sm:$0xff] %v398
        %v401 = vld [vmem:[#allocation4] sm:$0xff]
        %v402 = vld [vmem:[#allocation3] sm:$0xff]
        %v403 = vld [vmem:[#allocation3 + $0x8] sm:$0xff]
        %v404 = vld [vmem:[#allocation3 + $0x10] sm:$0xff]
        %v405 = vld [vmem:[#allocation3 + $0x18] sm:$0xff]
        %v406 = vld [vmem:[#allocation3 + $0x20] sm:$0xff]
        %v407 = vld [vmem:[#allocation3 + $0x28] sm:$0xff]
        %v408 = vld [vmem:[#allocation3 + $0x30] sm:$0xff]
        %v409 = vld [vmem:[#allocation3 + $0x38] sm:$0xff]
        %v410 = vld [vmem:[#allocation3 + $0x40] sm:$0xff]
        %v411 = vld [vmem:[#allocation3 + $0x48] sm:$0xff]
        %v412 = vld [vmem:[#allocation3 + $0x50] sm:$0xff]
        %v413 = vld [vmem:[#allocation3 + $0x58] sm:$0xff]
        %v414 = vld [vmem:[#allocation3 + $0x60] sm:$0xff]
        %v415 = vld [vmem:[#allocation3 + $0x68] sm:$0xff]
        %v416 = vld [vmem:[#allocation3 + $0x70] sm:$0xff]
        %v417 = vld [vmem:[#allocation3 + $0x78] sm:$0xff]
        %v418 = vld [vmem:[#allocation3 + $0x80] sm:$0xff]
        %v419 = vld [vmem:[#allocation3 + $0x88] sm:$0xff]
        %v420 = vld [vmem:[%s2] sm:$0xff]
        %422 = vset.pattern.permute.xlu0 0
        %423 = vperm.xlu0 %422, %v420
        %v424 = vpop.permute.xlu0 %423
        %vm426 = vcmask 588800
        %v428 = vsel %vm426, %v401, 0
        %430 = vmatprep.subr.mxu0 0.0
        %431 = vmatpush1.msra.mxu0 0.0
        %432 = vmatprep.subr.mxu0 0.0
        %433 = vmatpush1.msra.mxu0 0.0
        %434 = vmatprep.subr.mxu0 0.0
        %435 = vmatpush1.msra.mxu0 0.0
        %436 = vmatprep.subr.mxu0 0.0
        %437 = vmatpush1.msra.mxu0 0.0
        %438 = vmatprep.subr.mxu0 0.0
        %439 = vmatpush1.msra.mxu0 0.0
        %440 = vmatprep.subr.mxu0 0.0
        %441 = vmatpush1.msra.mxu0 0.0
        %442 = vmatprep.subr.mxu0 0.0
        %443 = vmatpush1.msra.mxu0 0.0
        %444 = vmatprep.subr.mxu0 %v419
        %445 = vmatpush1.msra.mxu0 %v418
        %446 = vmatprep.subr.mxu0 %v417
        %447 = vmatpush1.msra.mxu0 %v416
        %448 = vmatprep.subr.mxu0 %v415
        %449 = vmatpush1.msra.mxu0 %v414
        %450 = vmatprep.subr.mxu0 %v413
        %451 = vmatpush1.msra.mxu0 %v412
        %452 = vmatprep.subr.mxu0 %v411
        %453 = vmatpush1.msra.mxu0 %v410
        %454 = vmatprep.subr.mxu0 %v409
        %455 = vmatpush1.msra.mxu0 %v408
        %456 = vmatprep.subr.mxu0 %v407
        %457 = vmatpush1.msra.mxu0 %v406
        %458 = vmatprep.subr.mxu0 %v405
        %459 = vmatpush1.msra.mxu0 %v404
        %460 = vmatprep.subr.mxu0 %v403
        %461 = vmatpush1.msra.mxu0 %v402
        %462 = vmatprep.subr.mxu0 0.0
        %463 = vmatpush2.msra.mxu0 0.0
        %464 = vmatprep.subr.mxu0 0.0
        %465 = vmatpush2.msra.mxu0 0.0
        %466 = vmatprep.subr.mxu0 0.0
        %467 = vmatpush2.msra.mxu0 0.0
        %468 = vmatprep.subr.mxu0 0.0
        %469 = vmatpush2.msra.mxu0 0.0
        %470 = vmatprep.subr.mxu0 0.0
        %471 = vmatpush2.msra.mxu0 0.0
        %472 = vmatprep.subr.mxu0 0.0
        %473 = vmatpush2.msra.mxu0 0.0
        %474 = vmatprep.subr.mxu0 0.0
        %475 = vmatpush2.msra.mxu0 0.0
        %476 = vmatprep.subr.mxu0 0.0
        %477 = vmatpush2.msra.mxu0 0.0
        %478 = vmatprep.subr.mxu0 0.0
        %479 = vmatpush2.msra.mxu0 0.0
        %480 = vmatprep.subr.mxu0 0.0
        %481 = vmatpush2.msra.mxu0 0.0
        %482 = vmatprep.subr.mxu0 0.0
        %483 = vmatpush2.msra.mxu0 0.0
        %484 = vmatprep.subr.mxu0 0.0
        %485 = vmatpush2.msra.mxu0 0.0
        %486 = vmatprep.subr.mxu0 0.0
        %487 = vmatpush2.msra.mxu0 0.0
        %488 = vmatprep.subr.mxu0 0.0
        %489 = vmatpush2.msra.mxu0 0.0
        %490 = vmatprep.subr.mxu0 0.0
        %491 = vmatpush2.msra.mxu0 0.0
        %492 = vmatprep.subr.mxu0 0.0
        %493 = vmatpush2.msra.mxu0 0.0
        %494 = vmatprep.mubr.f32.mxu0 0.0
        %495 = vmatmul.mubr.f32.gmra.mxu0 %v428
        %v496 = vpop.f32.mrf.mxu0
        %v497 = vadd.f32 %v424, %v496
        %v498 = vpop.f32.mrf.mxu0
        %v499 = vadd.f32 %v424, %v498
        %500 = vdwg.mxu0
        %v501 = vmax.f32 %v497, 0.0
        %v502 = vmax.f32 %v499, 0.0
        %503 = vst [vmem:[#allocation2 + $0x8] sm:$0xff] %v501
        %504 = vst [vmem:[#allocation2 + $0x10] sm:$0xff] %v502
        %v505 = vld [vmem:[#allocation2] sm:$0xff]
        %v506 = vld [vmem:[#allocation2 + $0x8] sm:$0xff]
        %v507 = vld [vmem:[#allocation2 + $0x10] sm:$0xff]
        %511 = vrot.lane.b32.xlu0 %v505, 17
        %v512 = vpop.permute.xlu0 %511
        %513 = vrot.lane.b32.xlu0 %v506, 17
        %v514 = vpop.permute.xlu0 %513
        %515 = vrot.lane.b32.xlu0 %v507, 17
        %v516 = vpop.permute.xlu0 %515
        %v517 = vsel %vm241, %v512, %v514
        %v518 = vsel %vm241, %v514, %v516
        %v521 = vsel %vm230, %v517, 0.0
        %v522 = vsel %vm231, %v518, 0.0
        %523 = vst [vmem:[#allocation3] sm:$0xff] %v521
        %524 = vst [vmem:[#allocation3 + $0x8] sm:$0xff] %v522
        %v525 = vld [vmem:[#allocation2] sm:$0xff]
        %v526 = vld [vmem:[#allocation2 + $0x8] sm:$0xff]
        %v527 = vld [vmem:[#allocation2 + $0x10] sm:$0xff]
        %531 = vrot.lane.b32.xlu0 %v525, 16
        %v532 = vpop.permute.xlu0 %531
        %533 = vrot.lane.b32.xlu0 %v526, 16
        %v534 = vpop.permute.xlu0 %533
        %535 = vrot.lane.b32.xlu0 %v527, 16
        %v536 = vpop.permute.xlu0 %535
        %v537 = vsel %vm262, %v532, %v534
        %v538 = vsel %vm262, %v534, %v536
        %541 = vst [vmem:[#allocation3 + $0x10] sm:$0xff] %v537
        %542 = vst [vmem:[#allocation3 + $0x18] sm:$0xff] %v538
        %v543 = vld [vmem:[#allocation2] sm:$0xff]
        %v544 = vld [vmem:[#allocation2 + $0x8] sm:$0xff]
        %v545 = vld [vmem:[#allocation2 + $0x10] sm:$0xff]
        %549 = vrot.lane.b32.xlu0 %v543, 15
        %v550 = vpop.permute.xlu0 %549
        %551 = vrot.lane.b32.xlu0 %v544, 15
        %v552 = vpop.permute.xlu0 %551
        %553 = vrot.lane.b32.xlu0 %v545, 15
        %v554 = vpop.permute.xlu0 %553
        %v555 = vsel %vm285, %v550, %v552
        %v556 = vsel %vm285, %v552, %v554
        %v559 = vsel %vm274, %v555, 0.0
        %v560 = vsel %vm275, %v556, 0.0
        %561 = vst [vmem:[#allocation3 + $0x20] sm:$0xff] %v559
        %562 = vst [vmem:[#allocation3 + $0x28] sm:$0xff] %v560
        %v563 = vld [vmem:[#allocation2] sm:$0xff]
        %v564 = vld [vmem:[#allocation2 + $0x8] sm:$0xff]
        %v565 = vld [vmem:[#allocation2 + $0x10] sm:$0xff]
        %569 = vrot.lane.b32.xlu0 %v563, 1
        %v570 = vpop.permute.xlu0 %569
        %571 = vrot.lane.b32.xlu0 %v564, 1
        %v572 = vpop.permute.xlu0 %571
        %573 = vrot.lane.b32.xlu0 %v565, 1
        %v574 = vpop.permute.xlu0 %573
        %v575 = vsel %vm306, %v570, %v572
        %v576 = vsel %vm306, %v572, %v574
        %v579 = vsel %vm230, %v575, 0.0
        %v580 = vsel %vm231, %v576, 0.0
        %581 = vst [vmem:[#allocation3 + $0x30] sm:$0xff] %v579
        %582 = vst [vmem:[#allocation3 + $0x38] sm:$0xff] %v580
        %v583 = vld [vmem:[#allocation2 + $0x8] sm:$0xff]
        %v584 = vld [vmem:[#allocation2 + $0x10] sm:$0xff]
        %585 = vst [vmem:[#allocation3 + $0x40] sm:$0xff] %v583
        %586 = vst [vmem:[#allocation3 + $0x48] sm:$0xff] %v584
        %v587 = vld [vmem:[#allocation2 + $0x8] sm:$0xff]
        %v588 = vld [vmem:[#allocation2 + $0x10] sm:$0xff]
        %v589 = vld [vmem:[#allocation2 + $0x18] sm:$0xff]
        %593 = vrot.lane.b32.xlu0 %v587, 127
        %v594 = vpop.permute.xlu0 %593
        %595 = vrot.lane.b32.xlu0 %v588, 127
        %v596 = vpop.permute.xlu0 %595
        %597 = vrot.lane.b32.xlu0 %v589, 127
        %v598 = vpop.permute.xlu0 %597
        %v599 = vsel %vm331, %v594, %v596
        %v600 = vsel %vm331, %v596, %v598
        %v603 = vsel %vm274, %v599, 0.0
        %v604 = vsel %vm275, %v600, 0.0
        %605 = vst [vmem:[#allocation3 + $0x50] sm:$0xff] %v603
        %606 = vst [vmem:[#allocation3 + $0x58] sm:$0xff] %v604
        %v607 = vld [vmem:[#allocation2 + $0x8] sm:$0xff]
        %v608 = vld [vmem:[#allocation2 + $0x10] sm:$0xff]
        %v609 = vld [vmem:[#allocation2 + $0x18] sm:$0xff]
        %613 = vrot.lane.b32.xlu0 %v607, 113
        %v614 = vpop.permute.xlu0 %613
        %615 = vrot.lane.b32.xlu0 %v608, 113
        %v616 = vpop.permute.xlu0 %615
        %617 = vrot.lane.b32.xlu0 %v609, 113
        %v618 = vpop.permute.xlu0 %617
        %v619 = vsel %vm352, %v614, %v616
        %v620 = vsel %vm352, %v616, %v618
        %v623 = vsel %vm230, %v619, 0.0
        %v624 = vsel %vm231, %v620, 0.0
        %625 = vst [vmem:[#allocation3 + $0x60] sm:$0xff] %v623
        %626 = vst [vmem:[#allocation3 + $0x68] sm:$0xff] %v624
        %v627 = vld [vmem:[#allocation2 + $0x8] sm:$0xff]
        %v628 = vld [vmem:[#allocation2 + $0x10] sm:$0xff]
        %v629 = vld [vmem:[#allocation2 + $0x18] sm:$0xff]
        %633 = vrot.lane.b32.xlu0 %v627, 112
        %v634 = vpop.permute.xlu0 %633
        %635 = vrot.lane.b32.xlu0 %v628, 112
        %v636 = vpop.permute.xlu0 %635
        %637 = vrot.lane.b32.xlu0 %v629, 112
        %v638 = vpop.permute.xlu0 %637
        %v639 = vsel %vm373, %v634, %v636
        %v640 = vsel %vm373, %v636, %v638
        %643 = vst [vmem:[#allocation3 + $0x70] sm:$0xff] %v639
        %644 = vst [vmem:[#allocation3 + $0x78] sm:$0xff] %v640
        %v645 = vld [vmem:[#allocation2 + $0x8] sm:$0xff]
        %v646 = vld [vmem:[#allocation2 + $0x10] sm:$0xff]
        %v647 = vld [vmem:[#allocation2 + $0x18] sm:$0xff]
        %651 = vrot.lane.b32.xlu0 %v645, 111
        %v652 = vpop.permute.xlu0 %651
        %653 = vrot.lane.b32.xlu0 %v646, 111
        %v654 = vpop.permute.xlu0 %653
        %655 = vrot.lane.b32.xlu0 %v647, 111
        %v656 = vpop.permute.xlu0 %655
        %v657 = vsel %vm392, %v652, %v654
        %v658 = vsel %vm392, %v654, %v656
        %v661 = vsel %vm274, %v657, 0.0
        %v662 = vsel %vm275, %v658, 0.0
        %663 = vst [vmem:[#allocation3 + $0x80] sm:$0xff] %v661
        %664 = vst [vmem:[#allocation3 + $0x88] sm:$0xff] %v662
        %s665 = scalar_lea.vmem [#allocation4], 8
        %v666 = vld [vmem:[%s665] sm:$0xff]
        %v667 = vld [vmem:[#allocation3] sm:$0xff]
        %v668 = vld [vmem:[#allocation3 + $0x8] sm:$0xff]
        %v669 = vld [vmem:[#allocation3 + $0x10] sm:$0xff]
        %v670 = vld [vmem:[#allocation3 + $0x18] sm:$0xff]
        %v671 = vld [vmem:[#allocation3 + $0x20] sm:$0xff]
        %v672 = vld [vmem:[#allocation3 + $0x28] sm:$0xff]
        %v673 = vld [vmem:[#allocation3 + $0x30] sm:$0xff]
        %v674 = vld [vmem:[#allocation3 + $0x38] sm:$0xff]
        %v675 = vld [vmem:[#allocation3 + $0x40] sm:$0xff]
        %v676 = vld [vmem:[#allocation3 + $0x48] sm:$0xff]
        %v677 = vld [vmem:[#allocation3 + $0x50] sm:$0xff]
        %v678 = vld [vmem:[#allocation3 + $0x58] sm:$0xff]
        %v679 = vld [vmem:[#allocation3 + $0x60] sm:$0xff]
        %v680 = vld [vmem:[#allocation3 + $0x68] sm:$0xff]
        %v681 = vld [vmem:[#allocation3 + $0x70] sm:$0xff]
        %v682 = vld [vmem:[#allocation3 + $0x78] sm:$0xff]
        %v683 = vld [vmem:[#allocation3 + $0x80] sm:$0xff]
        %v684 = vld [vmem:[#allocation3 + $0x88] sm:$0xff]
        %s685 = scalar_lea.vmem %s2, 8
        %v686 = vld [vmem:[%s685] sm:$0xff]
        %688 = vset.pattern.permute.xlu0 0
        %689 = vperm.xlu0 %688, %v686
        %v690 = vpop.permute.xlu0 %689
        %v693 = vsel %vm426, %v666, 0
        %695 = vmatprep.subr.mxu0 0.0
        %696 = vmatpush1.msra.mxu0 0.0
        %697 = vmatprep.subr.mxu0 0.0
        %698 = vmatpush1.msra.mxu0 0.0
        %699 = vmatprep.subr.mxu0 0.0
        %700 = vmatpush1.msra.mxu0 0.0
        %701 = vmatprep.subr.mxu0 0.0
        %702 = vmatpush1.msra.mxu0 0.0
        %703 = vmatprep.subr.mxu0 0.0
        %704 = vmatpush1.msra.mxu0 0.0
        %705 = vmatprep.subr.mxu0 0.0
        %706 = vmatpush1.msra.mxu0 0.0
        %707 = vmatprep.subr.mxu0 0.0
        %708 = vmatpush1.msra.mxu0 0.0
        %709 = vmatprep.subr.mxu0 %v684
        %710 = vmatpush1.msra.mxu0 %v683
        %711 = vmatprep.subr.mxu0 %v682
        %712 = vmatpush1.msra.mxu0 %v681
        %713 = vmatprep.subr.mxu0 %v680
        %714 = vmatpush1.msra.mxu0 %v679
        %715 = vmatprep.subr.mxu0 %v678
        %716 = vmatpush1.msra.mxu0 %v677
        %717 = vmatprep.subr.mxu0 %v676
        %718 = vmatpush1.msra.mxu0 %v675
        %719 = vmatprep.subr.mxu0 %v674
        %720 = vmatpush1.msra.mxu0 %v673
        %721 = vmatprep.subr.mxu0 %v672
        %722 = vmatpush1.msra.mxu0 %v671
        %723 = vmatprep.subr.mxu0 %v670
        %724 = vmatpush1.msra.mxu0 %v669
        %725 = vmatprep.subr.mxu0 %v668
        %726 = vmatpush1.msra.mxu0 %v667
        %727 = vmatprep.subr.mxu0 0.0
        %728 = vmatpush2.msra.mxu0 0.0
        %729 = vmatprep.subr.mxu0 0.0
        %730 = vmatpush2.msra.mxu0 0.0
        %731 = vmatprep.subr.mxu0 0.0
        %732 = vmatpush2.msra.mxu0 0.0
        %733 = vmatprep.subr.mxu0 0.0
        %734 = vmatpush2.msra.mxu0 0.0
        %735 = vmatprep.subr.mxu0 0.0
        %736 = vmatpush2.msra.mxu0 0.0
        %737 = vmatprep.subr.mxu0 0.0
        %738 = vmatpush2.msra.mxu0 0.0
        %739 = vmatprep.subr.mxu0 0.0
        %740 = vmatpush2.msra.mxu0 0.0
        %741 = vmatprep.subr.mxu0 0.0
        %742 = vmatpush2.msra.mxu0 0.0
        %743 = vmatprep.subr.mxu0 0.0
        %744 = vmatpush2.msra.mxu0 0.0
        %745 = vmatprep.subr.mxu0 0.0
        %746 = vmatpush2.msra.mxu0 0.0
        %747 = vmatprep.subr.mxu0 0.0
        %748 = vmatpush2.msra.mxu0 0.0
        %749 = vmatprep.subr.mxu0 0.0
        %750 = vmatpush2.msra.mxu0 0.0
        %751 = vmatprep.subr.mxu0 0.0
        %752 = vmatpush2.msra.mxu0 0.0
        %753 = vmatprep.subr.mxu0 0.0
        %754 = vmatpush2.msra.mxu0 0.0
        %755 = vmatprep.subr.mxu0 0.0
        %756 = vmatpush2.msra.mxu0 0.0
        %757 = vmatprep.subr.mxu0 0.0
        %758 = vmatpush2.msra.mxu0 0.0
        %759 = vmatprep.mubr.f32.mxu0 0.0
        %760 = vmatmul.mubr.f32.gmra.mxu0 %v693
        %v761 = vpop.f32.mrf.mxu0
        %v762 = vadd.f32 %v690, %v761
        %v763 = vpop.f32.mrf.mxu0
        %v764 = vadd.f32 %v690, %v763
        %765 = vdwg.mxu0
        %v766 = vmax.f32 %v762, 0.0
        %v767 = vmax.f32 %v764, 0.0
        %768 = vst [vmem:[%s178] sm:$0xff] %v766
        %769 = vst [vmem:[%s178 + $0x8] sm:$0xff] %v767
        %s770 = sand.u32 %s94, 1
        %s771 = scalar_lea.sflag [#allocation6], %s770
        %s772 = sand.u32 %s94, 1
        %s773 = smul.addr %s772, 16
        %s774 = scalar_lea.vmem [#allocation7], %s773
        // Predicated region
        $region37: #{tpu_custom_call.1} parent=31 // pred_check
          %p775 = pneg %p104
        $region38: #{tpu_custom_call.1} parent=31 // pred_check_branch
          %777 = sbr.rel (%p775) target = $region40
        $region39: #{tpu_custom_call.1} parent=31 // pred_region
          %s779 = ssub.s32 256, 256
          %780 = vsyncadd %s771, %s779
          %s781 = smul.addr %s18, 2
          %s782 = smul.addr %s781, 128
          %s783 = scalar_lea.hbm %s3, %s782
          %s785 = sshll.u32 %s774, 4
          %s786 = int_to_ptr.vmem [resolvable:$true] %s785
          %788 = dma.vmem_to_hbm [thread:$0]  %s786, 256, %s783, %s771
        $region40: #{tpu_custom_call.1} parent=31 // pred_fallthru
          _
      $region32: #{tpu_custom_call.1} parent=5 // pred_fallthru
        _
      %p789 = scmp.le.s32.totalorder 2, %s13
      // Predicated region
      $region41: #{tpu_custom_call.1} parent=5 // pred_check
        %p790 = pneg %p789
      $region42: #{tpu_custom_call.1} parent=5 // pred_check_branch
        %792 = sbr.rel (%p790) target = $region44
      $region43: #{tpu_custom_call.1} parent=5 // pred_region
        %s793 = ssub.s32 %s13, 2
        // Predicated region
        $region45: #{tpu_custom_call.1} parent=43 // pred_check
          %p794 = pneg %p110
        $region46: #{tpu_custom_call.1} parent=43 // pred_check_branch
          %796 = sbr.rel (%p794) target = $region48
        $region47: #{tpu_custom_call.1} parent=43 // pred_region
          %s797 = sand.u32 %s95, 1
          %s798 = scalar_lea.sflag [#allocation6], %s797
          %s799 = sand.u32 %s95, 1
          %s800 = smul.addr %s799, 16
          %s801 = scalar_lea.vmem [#allocation7], %s800
          %802 = dma.done %s798, 256
        $region48: #{tpu_custom_call.1} parent=43 // pred_fallthru
          _
      $region44: #{tpu_custom_call.1} parent=5 // pred_fallthru
        _
    $region6: #{tpu_custom_call.1} parent=1 // loop_footer
      %s17 = sadd.s32 1, %s13
    $region7: #{tpu_custom_call.1} parent=1 // loop_footer_branch
      %12 = sbr.rel target = $region3
    $region8: #{tpu_custom_call.1} parent=1 // loop_exit
      _
    %803 = vsyncpa [#allocation5], 1
    %s804 = scalar_lea.sflag [#allocation5], 1
    %805 = vsyncpa %s804, 1
    %806 = vsyncpa [#allocation6], 1
    %s807 = scalar_lea.sflag [#allocation6], 1
    %808 = vsyncpa %s807, 1

</llo_original>
